<compile_context>
chip_gen: v6e
topology: v6e:2x2x1
jax: 0.10.0
libtpu: 0.0.40
codegen_flags: <defaults>
</compile_context>

<pallas_src>
import functools

import jax
import jax.numpy as jnp
from jax.experimental import pallas as pl
from jax.experimental.pallas import tpu as pltpu


def _round_up(x, m):
    return ((x + m - 1) // m) * m


def _choose_bb(B, Op, target_rows=256):
    """Batch elements per grid step: fill the matmul M dim, keep >=2 grid steps."""
    cap = max(1, min(B, target_rows // max(Op, 1)))
    if B >= 2:
        cap = min(cap, max(1, B // 2))   # leave >=2 parallel steps (megacore / 2 TCs)
    for bb in range(cap, 0, -1):
        if B % bb == 0:
            return bb
    return 1


def _attention_kernel(q_ref, c_ref, w_in_t_ref, w_mix_t_ref, w_q_t_ref,
                      out_ref, wts_ref, *, q_len):
    Bb, Op, Dp = q_ref.shape
    Qp = c_ref.shape[1]

    q = q_ref[...]                       # (Bb, Op, Dp)
    ctx = c_ref[...]                     # (Bb, Qp, Dp)

    # linear_in: single (Bb*Op, Dp) x (Dp, Dp) MXU matmul, weight pre-transposed.
    q2 = q.reshape(Bb * Op, Dp)
    qg2 = jnp.dot(q2, w_in_t_ref[...], preferred_element_type=jnp.float32)
    qg3 = qg2.reshape(Bb, Op, Dp)

    # attention scores: contract shared feature axis directly (no ctx transpose).
    scores = jax.lax.dot_general(
        qg3, ctx,
        dimension_numbers=(((2,), (2,)), ((0,), (0,))),
        preferred_element_type=jnp.float32)          # (Bb, Op, Qp)

    # mask padded context positions so they get zero sparsemax weight.
    col = jax.lax.broadcasted_iota(jnp.int32, (Bb, Op, Qp), 2)
    scores = jnp.where(col < q_len, scores, -1e30)

    # ---- Sparsemax over the last axis, O(Op*Qp) memory/compute --------------
    # tau solves sum_j max(z_j - tau, 0) = 1; f is monotone decreasing, and with
    # z shifted so max(z)=0 we have tau in [-1, 0].  Bisection localizes tau,
    # then tau is recomputed exactly from the identified support (boundary ties
    # do not change tau, so this matches the sort-based reference).
    z = scores - jnp.max(scores, axis=-1, keepdims=True)

    lo = jnp.full((Bb, Op, 1), -1.0, jnp.float32)    # invariant: f(lo) >= 1
    hi = jnp.zeros((Bb, Op, 1), jnp.float32)         # f(hi) <= 1

    def _bisect(_, carry):
        lo_c, hi_c = carry
        mid = 0.5 * (lo_c + hi_c)
        f = jnp.sum(jnp.maximum(z - mid, 0.0), axis=-1, keepdims=True)
        ge = f >= 1.0
        return jnp.where(ge, mid, lo_c), jnp.where(ge, hi_c, mid)

    lo, hi = jax.lax.fori_loop(0, 30, _bisect, (lo, hi))

    supp = (z > lo).astype(jnp.float32)              # support set (k >= 1 guaranteed)
    k = jnp.sum(supp, axis=-1, keepdims=True)
    s = jnp.sum(supp * z, axis=-1, keepdims=True)
    tau = (s - 1.0) / k                              # exact divide (k is tiny work)
    attn_w = jnp.maximum(z - tau, 0.0)               # (Bb, Op, Qp); padded cols -> 0
    # --------------------------------------------------------------------------

    # mix = weights @ context
    mix = jax.lax.dot_general(
        attn_w, ctx,
        dimension_numbers=(((2,), (1,)), ((0,), (0,))),
        preferred_element_type=jnp.float32)          # (Bb, Op, Dp)

    # linear_out(cat([mix, qg])) with pre-split / pre-transposed weights.
    mix2 = mix.reshape(Bb * Op, Dp)
    out2 = jnp.dot(mix2, w_mix_t_ref[...], preferred_element_type=jnp.float32)
    out2 = out2 + jnp.dot(qg2, w_q_t_ref[...], preferred_element_type=jnp.float32)
    out2 = jnp.tanh(out2)

    out_ref[...] = out2.reshape(Bb, Op, Dp).astype(out_ref.dtype)
    wts_ref[...] = attn_w.astype(wts_ref.dtype)


def attention_forward(query, context, w_in, w_out):
    B, O, D = query.shape
    Q = context.shape[1]

    Dp = _round_up(D, 128)
    Qp = _round_up(Q, 128)
    Op = _round_up(O, 8)
    Bb = _choose_bb(B, Op)

    # Pre-transpose / split / zero-pad weights once in XLA (outside the grid loop).
    w_in_t = jnp.zeros((Dp, Dp), jnp.float32).at[:D, :D].set(w_in.T)
    w_mix_t = jnp.zeros((Dp, Dp), jnp.float32).at[:D, :D].set(w_out[:, :D].T)
    w_q_t = jnp.zeros((Dp, Dp), jnp.float32).at[:D, :D].set(w_out[:, D:].T)

    # Zero-pad activations to lane-dense shapes.
    q_p = jnp.zeros((B, Op, Dp), jnp.float32).at[:, :O, :D].set(query)
    c_p = jnp.zeros((B, Qp, Dp), jnp.float32).at[:, :Q, :D].set(context)

    kernel = functools.partial(_attention_kernel, q_len=Q)

    out_p, wts_p = pl.pallas_call(
        kernel,
        out_shape=(
            jax.ShapeDtypeStruct((B, Op, Dp), jnp.float32),   # attended output (padded)
            jax.ShapeDtypeStruct((B, Op, Qp), jnp.float32),   # attention weights (padded)
        ),
        grid_spec=pltpu.PrefetchScalarGridSpec(
            num_scalar_prefetch=0,
            grid=(B // Bb,),
            in_specs=[
                pl.BlockSpec((Bb, Op, Dp), lambda b: (b, 0, 0)),   # query (padded)
                pl.BlockSpec((Bb, Qp, Dp), lambda b: (b, 0, 0)),   # context (padded)
                pl.BlockSpec((Dp, Dp), lambda b: (0, 0)),          # w_in.T
                pl.BlockSpec((Dp, Dp), lambda b: (0, 0)),          # w_out[:, :D].T
                pl.BlockSpec((Dp, Dp), lambda b: (0, 0)),          # w_out[:, D:].T
            ],
            out_specs=[
                pl.BlockSpec((Bb, Op, Dp), lambda b: (b, 0, 0)),
                pl.BlockSpec((Bb, Op, Qp), lambda b: (b, 0, 0)),
            ],
        ),
        compiler_params=pltpu.CompilerParams(
            dimension_semantics=("parallel",),
            vmem_limit_bytes=32 * 1024 * 1024,   # explicit budget; safe on v5e/v6e/v7x
        ),
    )(q_p, c_p, w_in_t, w_mix_t, w_q_t)

    return out_p[:, :O, :D], wts_p[:, :O, :Q]


# ---------------------- pure-JAX reference (for checking) -------------------
def _sparsemax_ref(z):
    z = z - jnp.max(z, axis=-1, keepdims=True)
    zs = -jnp.sort(-z, axis=-1)
    r = jnp.arange(1, z.shape[-1] + 1, dtype=z.dtype)
    cs = jnp.cumsum(zs, axis=-1)
    is_gt = (1.0 + r * zs > cs).astype(z.dtype)
    k = jnp.max(is_gt * r, axis=-1, keepdims=True)
    tau = (jnp.sum(is_gt * zs, axis=-1, keepdims=True) - 1.0) / k
    return jnp.maximum(z - tau, 0.0)


def _attention_ref(query, context, w_in, w_out):
    qg = query @ w_in.T
    scores = jnp.einsum('bod,bqd->boq', qg, context)
    w = _sparsemax_ref(scores)
    mix = jnp.einsum('boq,bqd->bod', w, context)
    combined = jnp.concatenate([mix, qg], axis=-1)
    out = jnp.tanh(combined @ w_out.T)
    return out, w
# -----------------------------------------------------------------------------


if __name__ == "__main__":
    B, O, Q, D = 2, 4, 8, 32   # batch, output_len, query_len (context), dimensions

    key = jax.random.PRNGKey(0)
    kq, kc, k1, k2 = jax.random.split(key, 4)

    query = jax.random.normal(kq, (B, O, D), dtype=jnp.float32)
    context = jax.random.normal(kc, (B, Q, D), dtype=jnp.float32)

    # Deterministic parameter init (matches torch Linear weight shapes).
    w_in = jax.random.uniform(k1, (D, D), jnp.float32,
                              minval=-1.0, maxval=1.0) / jnp.sqrt(D)
    w_out = jax.random.uniform(k2, (D, 2 * D), jnp.float32,
                               minval=-1.0, maxval=1.0) / jnp.sqrt(2 * D)

    out, weights = attention_forward(query, context, w_in, w_out)
    jax.block_until_ready((out, weights))

    out_ref, w_ref = _attention_ref(query, context, w_in, w_out)
    assert jnp.allclose(out, out_ref, atol=1e-4, rtol=1e-4), "output mismatch"
    assert jnp.allclose(weights, w_ref, atol=1e-4, rtol=1e-4), "weights mismatch"

    print("KERNEL_OK")
</pallas_src>

<mosaic_0001>
module attributes {stable_mosaic.version = 11 : i64} {
  func.func @_attention_kernel(%arg0: i32, %arg1: memref<1x8x128xf32, #tpu.memory_space<vmem>>, %arg2: memref<1x128x128xf32, #tpu.memory_space<vmem>>, %arg3: memref<128x128xf32, #tpu.memory_space<vmem>>, %arg4: memref<128x128xf32, #tpu.memory_space<vmem>>, %arg5: memref<128x128xf32, #tpu.memory_space<vmem>>, %arg6: memref<1x8x128xf32, #tpu.memory_space<vmem>>, %arg7: memref<1x8x128xf32, #tpu.memory_space<vmem>>) attributes {dimension_semantics = [#tpu.dimension_semantics<parallel>], iteration_bounds = array<i64: 2>, scalar_prefetch = 0 : i64, scratch_operands = 0 : i64, tpu.core_type = #tpu.core_type<tc>, window_params = [{transform_indices = @transform_0, window_bounds = array<i64: 1, 8, 128>}, {transform_indices = @transform_1, window_bounds = array<i64: 1, 128, 128>}, {pipeline_mode = #tpu.pipeline_mode<synchronous>, transform_indices = @transform_2, window_bounds = array<i64: 128, 128>}, {pipeline_mode = #tpu.pipeline_mode<synchronous>, transform_indices = @transform_3, window_bounds = array<i64: 128, 128>}, {pipeline_mode = #tpu.pipeline_mode<synchronous>, transform_indices = @transform_4, window_bounds = array<i64: 128, 128>}, {transform_indices = @transform_5, window_bounds = array<i64: 1, 8, 128>}, {transform_indices = @transform_6, window_bounds = array<i64: 1, 8, 128>}]} {
    %c0 = arith.constant 0 : index
    %c0_0 = arith.constant 0 : index
    %c0_1 = arith.constant 0 : index
    %0 = vector.load %arg1[%c0, %c0_0, %c0_1] : memref<1x8x128xf32, #tpu.memory_space<vmem>>, vector<1x8x128xf32>
    %c0_2 = arith.constant 0 : index
    %c0_3 = arith.constant 0 : index
    %c0_4 = arith.constant 0 : index
    %1 = vector.load %arg2[%c0_2, %c0_3, %c0_4] : memref<1x128x128xf32, #tpu.memory_space<vmem>>, vector<1x128x128xf32>
    %2 = vector.shape_cast %0 : vector<1x8x128xf32> to vector<8x128xf32>
    %c0_5 = arith.constant 0 : index
    %c0_6 = arith.constant 0 : index
    %3 = vector.load %arg3[%c0_5, %c0_6] : memref<128x128xf32, #tpu.memory_space<vmem>>, vector<128x128xf32>
    %cst = arith.constant dense<0.000000e+00> : vector<8x128xf32>
    %4 = tpu.matmul %2, %3, %cst {dimension_numbers = #tpu.dot_dimension_numbers<[1], [0], [0], [1], [0, 0, 1, 1], [], []>} : vector<8x128xf32>, vector<128x128xf32>, vector<8x128xf32> -> vector<8x128xf32>
    %5 = vector.shape_cast %4 : vector<8x128xf32> to vector<1x8x128xf32>
    %cst_7 = arith.constant dense<0.000000e+00> : vector<1x8x128xf32>
    %6 = tpu.matmul %5, %1, %cst_7 {dimension_numbers = #tpu.dot_dimension_numbers<[2], [2], [1], [1], [0, 0, 0, 1, 1, 1], [0], [0]>} : vector<1x8x128xf32>, vector<1x128x128xf32>, vector<1x8x128xf32> -> vector<1x8x128xf32>
    %7 = tpu.iota {dimensions = array<i32: 2>} : vector<1x8x128xi32>
    %c8_i32 = arith.constant 8 : i32
    %8 = vector.broadcast %c8_i32 : i32 to vector<1x8x128xi32>
    %9 = arith.cmpi slt, %7, %8 : vector<1x8x128xi32>
    %cst_8 = arith.constant -1.000000e+30 : f32
    %10 = vector.broadcast %cst_8 : f32 to vector<1x8x128xf32>
    %11 = arith.select %9, %6, %10 : vector<1x8x128xi1>, vector<1x8x128xf32>
    %cst_9 = arith.constant dense<0xFF800000> : vector<1x8xf32>
    %12 = vector.multi_reduction <maximumf>, %11, %cst_9 [2] : vector<1x8x128xf32> to vector<1x8xf32>
    %13 = vector.shape_cast %12 : vector<1x8xf32> to vector<1x8x1xf32>
    %14 = vector.broadcast %13 : vector<1x8x1xf32> to vector<1x8x128xf32>
    %15 = arith.subf %11, %14 : vector<1x8x128xf32>
    %cst_10 = arith.constant -1.000000e+00 : f32
    %16 = vector.broadcast %cst_10 : f32 to vector<1x8x1xf32>
    %cst_11 = arith.constant 0.000000e+00 : f32
    %17 = vector.broadcast %cst_11 : f32 to vector<1x8x1xf32>
    %c0_i32 = arith.constant 0 : i32
    %c30_i32 = arith.constant 30 : i32
    %18 = arith.addi %c0_i32, %c30_i32 : i32
    %c1_i32 = arith.constant 1 : i32
    %19:2 = scf.for %arg8 = %c0_i32 to %18 step %c1_i32 iter_args(%arg9 = %16, %arg10 = %17) -> (vector<1x8x1xf32>, vector<1x8x1xf32>)  : i32 {
      %47 = arith.addf %arg9, %arg10 : vector<1x8x1xf32>
      %cst_29 = arith.constant 5.000000e-01 : f32
      %48 = vector.broadcast %cst_29 : f32 to vector<1x8x1xf32>
      %49 = arith.mulf %48, %47 : vector<1x8x1xf32>
      %50 = vector.broadcast %49 : vector<1x8x1xf32> to vector<1x8x128xf32>
      %51 = arith.subf %15, %50 : vector<1x8x128xf32>
      %cst_30 = arith.constant 0.000000e+00 : f32
      %52 = vector.broadcast %cst_30 : f32 to vector<1x8x128xf32>
      %53 = arith.maximumf %51, %52 : vector<1x8x128xf32>
      %cst_31 = arith.constant dense<0.000000e+00> : vector<1x8xf32>
      %54 = vector.multi_reduction <add>, %53, %cst_31 [2] : vector<1x8x128xf32> to vector<1x8xf32>
      %55 = vector.shape_cast %54 : vector<1x8xf32> to vector<1x8x1xf32>
      %cst_32 = arith.constant 1.000000e+00 : f32
      %56 = vector.broadcast %cst_32 : f32 to vector<1x8x1xf32>
      %57 = arith.cmpf oge, %55, %56 : vector<1x8x1xf32>
      %58 = arith.select %57, %49, %arg9 : vector<1x8x1xi1>, vector<1x8x1xf32>
      %59 = arith.select %57, %arg10, %49 : vector<1x8x1xi1>, vector<1x8x1xf32>
      scf.yield %58, %59 : vector<1x8x1xf32>, vector<1x8x1xf32>
    }
    %20 = vector.broadcast %19#0 : vector<1x8x1xf32> to vector<1x8x128xf32>
    %21 = arith.cmpf ogt, %15, %20 : vector<1x8x128xf32>
    %22 = arith.extui %21 : vector<1x8x128xi1> to vector<1x8x128xi32>
    %23 = arith.sitofp %22 : vector<1x8x128xi32> to vector<1x8x128xf32>
    %cst_12 = arith.constant dense<0.000000e+00> : vector<1x8xf32>
    %24 = vector.multi_reduction <add>, %23, %cst_12 [2] : vector<1x8x128xf32> to vector<1x8xf32>
    %25 = vector.shape_cast %24 : vector<1x8xf32> to vector<1x8x1xf32>
    %26 = arith.mulf %23, %15 : vector<1x8x128xf32>
    %cst_13 = arith.constant dense<0.000000e+00> : vector<1x8xf32>
    %27 = vector.multi_reduction <add>, %26, %cst_13 [2] : vector<1x8x128xf32> to vector<1x8xf32>
    %28 = vector.shape_cast %27 : vector<1x8xf32> to vector<1x8x1xf32>
    %cst_14 = arith.constant 1.000000e+00 : f32
    %29 = vector.broadcast %cst_14 : f32 to vector<1x8x1xf32>
    %30 = arith.subf %28, %29 : vector<1x8x1xf32>
    %31 = arith.divf %30, %25 : vector<1x8x1xf32>
    %32 = vector.broadcast %31 : vector<1x8x1xf32> to vector<1x8x128xf32>
    %33 = arith.subf %15, %32 : vector<1x8x128xf32>
    %cst_15 = arith.constant 0.000000e+00 : f32
    %34 = vector.broadcast %cst_15 : f32 to vector<1x8x128xf32>
    %35 = arith.maximumf %33, %34 : vector<1x8x128xf32>
    %cst_16 = arith.constant dense<0.000000e+00> : vector<1x8x128xf32>
    %36 = tpu.matmul %35, %1, %cst_16 {dimension_numbers = #tpu.dot_dimension_numbers<[2], [1], [1], [2], [0, 0, 0, 1, 1, 2], [0], [0]>} : vector<1x8x128xf32>, vector<1x128x128xf32>, vector<1x8x128xf32> -> vector<1x8x128xf32>
    %37 = vector.shape_cast %36 : vector<1x8x128xf32> to vector<8x128xf32>
    %c0_17 = arith.constant 0 : index
    %c0_18 = arith.constant 0 : index
    %38 = vector.load %arg4[%c0_17, %c0_18] : memref<128x128xf32, #tpu.memory_space<vmem>>, vector<128x128xf32>
    %cst_19 = arith.constant dense<0.000000e+00> : vector<8x128xf32>
    %39 = tpu.matmul %37, %38, %cst_19 {dimension_numbers = #tpu.dot_dimension_numbers<[1], [0], [0], [1], [0, 0, 1, 1], [], []>} : vector<8x128xf32>, vector<128x128xf32>, vector<8x128xf32> -> vector<8x128xf32>
    %c0_20 = arith.constant 0 : index
    %c0_21 = arith.constant 0 : index
    %40 = vector.load %arg5[%c0_20, %c0_21] : memref<128x128xf32, #tpu.memory_space<vmem>>, vector<128x128xf32>
    %cst_22 = arith.constant dense<0.000000e+00> : vector<8x128xf32>
    %41 = tpu.matmul %4, %40, %cst_22 {dimension_numbers = #tpu.dot_dimension_numbers<[1], [0], [0], [1], [0, 0, 1, 1], [], []>} : vector<8x128xf32>, vector<128x128xf32>, vector<8x128xf32> -> vector<8x128xf32>
    %42 = arith.addf %39, %41 : vector<8x128xf32>
    %43 = math.tanh %42 : vector<8x128xf32>
    %44 = vector.shape_cast %43 : vector<8x128xf32> to vector<1x8x128xf32>
    %c0_23 = arith.constant 0 : index
    %c0_24 = arith.constant 0 : index
    %c0_25 = arith.constant 0 : index
    %45 = vector.load %arg6[%c0_23, %c0_24, %c0_25] : memref<1x8x128xf32, #tpu.memory_space<vmem>>, vector<1x8x128xf32>
    tpu.vector_store %arg6[%c0_23, %c0_24, %c0_25], %44 {strides = array<i32>} : memref<1x8x128xf32, #tpu.memory_space<vmem>>, vector<1x8x128xf32>,
    %c0_26 = arith.constant 0 : index
    %c0_27 = arith.constant 0 : index
    %c0_28 = arith.constant 0 : index
    %46 = vector.load %arg7[%c0_26, %c0_27, %c0_28] : memref<1x8x128xf32, #tpu.memory_space<vmem>>, vector<1x8x128xf32>
    tpu.vector_store %arg7[%c0_26, %c0_27, %c0_28], %35 {strides = array<i32>} : memref<1x8x128xf32, #tpu.memory_space<vmem>>, vector<1x8x128xf32>,
    return
  }
  func.func @transform_0(%arg0: i32) -> (i32, i32, i32) {
    %c0_i32 = arith.constant 0 : i32
    %c0_i32_0 = arith.constant 0 : i32
    %c0_i32_1 = arith.constant 0 : i32
    return %arg0, %c0_i32, %c0_i32_0 : i32, i32, i32
  }
  func.func @transform_1(%arg0: i32) -> (i32, i32, i32) {
    %c0_i32 = arith.constant 0 : i32
    %c0_i32_0 = arith.constant 0 : i32
    %c0_i32_1 = arith.constant 0 : i32
    return %arg0, %c0_i32, %c0_i32_0 : i32, i32, i32
  }
  func.func @transform_2(%arg0: i32) -> (i32, i32) {
    %c0_i32 = arith.constant 0 : i32
    %c0_i32_0 = arith.constant 0 : i32
    %c0_i32_1 = arith.constant 0 : i32
    return %c0_i32, %c0_i32_0 : i32, i32
  }
  func.func @transform_3(%arg0: i32) -> (i32, i32) {
    %c0_i32 = arith.constant 0 : i32
    %c0_i32_0 = arith.constant 0 : i32
    %c0_i32_1 = arith.constant 0 : i32
    return %c0_i32, %c0_i32_0 : i32, i32
  }
  func.func @transform_4(%arg0: i32) -> (i32, i32) {
    %c0_i32 = arith.constant 0 : i32
    %c0_i32_0 = arith.constant 0 : i32
    %c0_i32_1 = arith.constant 0 : i32
    return %c0_i32, %c0_i32_0 : i32, i32
  }
  func.func @transform_5(%arg0: i32) -> (i32, i32, i32) {
    %c0_i32 = arith.constant 0 : i32
    %c0_i32_0 = arith.constant 0 : i32
    %c0_i32_1 = arith.constant 0 : i32
    return %arg0, %c0_i32, %c0_i32_0 : i32, i32, i32
  }
  func.func @transform_6(%arg0: i32) -> (i32, i32, i32) {
    %c0_i32 = arith.constant 0 : i32
    %c0_i32_0 = arith.constant 0 : i32
    %c0_i32_1 = arith.constant 0 : i32
    return %arg0, %c0_i32, %c0_i32_0 : i32, i32, i32
  }
}

</mosaic_0001>

<llo_original>
// kernel: tpu_custom_call.1
$region0: #{tpu_custom_call.1}
  #allocation0 [shape = 'u32[]', space=smem, size = 0x4, offset = 0x4, fixed_abs, tag = 'smem constant byte address 0x4 - core index']
  #allocation1 [shape = 'u32[144,128]{1,0:T(1,128)}', space=vmem, size = 0x12000, scoped, tag = 'internal scratch']
  %s0 = inlined_call_operand.hbm [shape: f32[2,8,128], index: 0, kind: input, shape index: {}]
  %s1 = inlined_call_operand.hbm [shape: f32[2,128,128], index: 1, kind: input, shape index: {}]
  %s2 = inlined_call_operand.hbm [shape: f32[128,128], index: 2, kind: input, shape index: {}]
  %s3 = inlined_call_operand.hbm [shape: f32[128,128], index: 3, kind: input, shape index: {}]
  %s4 = inlined_call_operand.hbm [shape: f32[128,128], index: 4, kind: input, shape index: {}]
  %s5 = inlined_call_operand.hbm [shape: f32[2,8,128], index: 5, kind: output, shape index: {0}]
  %s6 = inlined_call_operand.hbm [shape: f32[2,8,128], index: 6, kind: output, shape index: {1}]
  %7 = xla_tuple %s5, %s6
  %s8 = sld [smem:[#allocation0]]
  $region88: #{tpu_custom_call.1} parent=0
    _
  %s10 = ssub.s32 1, %s8
  %s11 = scalar_select 0, %s10, %s8
  $region1: #{tpu_custom_call.1} parent=0
    #allocation2 [shape = 'u8[8192]{0}', space=vmem, size = 0x2000, scoped, tag = 'input window, operand 0']
    #allocation3 [shape = 's32[2]{0}', space=sflag, size = 0x8, scoped, tag = 'scoped memory for tpu_custom_call.1']
    #allocation4 [shape = 's32[2]{0}', space=sflag, size = 0x8, scoped, tag = 'scoped memory for tpu_custom_call.1']
    #allocation5 [shape = 'u8[131072]{0}', space=vmem, size = 0x20000, scoped, tag = 'input window, operand 1']
    #allocation6 [shape = 's32[2]{0}', space=sflag, size = 0x8, scoped, tag = 'scoped memory for tpu_custom_call.1']
    #allocation7 [shape = 'u8[65536]{0}', space=vmem, size = 0x10000, scoped, tag = 'input window, operand 2, single buffered']
    #allocation8 [shape = 'u8[65536]{0}', space=vmem, size = 0x10000, scoped, tag = 'input window, operand 3, single buffered']
    #allocation9 [shape = 's32[1]{0}', space=sflag, size = 0x4, scoped, tag = 'scoped memory for tpu_custom_call.1']
    #allocation10 [shape = 'u8[65536]{0}', space=vmem, size = 0x10000, scoped, tag = 'input window, operand 4, single buffered']
    #allocation11 [shape = 'u8[8192]{0}', space=vmem, size = 0x2000, scoped, tag = 'output window, operand 0']
    #allocation12 [shape = 'u8[8192]{0}', space=vmem, size = 0x2000, scoped, tag = 'output window, operand 1']
    #allocation13 [shape = 's32[2]{0}', space=sflag, size = 0x8, scoped, tag = 'scoped memory for tpu_custom_call.1']
    %12 = vsyncpa [#allocation3], 0
    %s13 = scalar_lea.sflag [#allocation3], 1
    %14 = vsyncpa %s13, 0
    %15 = vsyncpa [#allocation6], 0
    %s16 = scalar_lea.sflag [#allocation6], 1
    %17 = vsyncpa %s16, 0
    %18 = vsyncpa [#allocation9], 0
    %19 = vsyncpa [#allocation4], 0
    %s20 = scalar_lea.sflag [#allocation4], 1
    %21 = vsyncpa %s20, 0
    %22 = vsyncpa [#allocation13], 0
    %s23 = scalar_lea.sflag [#allocation13], 1
    %24 = vsyncpa %s23, 0
    loop: start=0, step=1, limit=4
    $region2: #{tpu_custom_call.1} parent=1 // loop_pre_header
      _
    $region3: #{tpu_custom_call.1} parent=1 // loop_header
      %s26 = sphi 0, %s30
      %p27 = scmp.ge.s32.totalorder %s26, 4
      %s36 = sphi 0, %s38
      %s39 = sphi 0, %s36
      %s40 = sphi 0, %s39
      %s56 = sphi 0, %s40
      %s62 = sphi 0, %s64
      %s65 = sphi 0, %s62
      %s66 = sphi 0, %s65
      %s82 = sphi 0, %s66
      %s86 = sphi 0, %s86
      %s88 = sphi 0, %s86
      %s89 = sphi 0, %s88
      %s103 = sphi 0, %s89
      %s107 = sphi 0, %s107
      %s109 = sphi 0, %s107
      %s110 = sphi 0, %s109
      %s124 = sphi 0, %s110
      %s128 = sphi 0, %s128
      %s130 = sphi 0, %s128
      %s131 = sphi 0, %s130
      %s145 = sphi 0, %s131
      %s151 = sphi 0, %s153
      %s154 = sphi 0, %s151
      %s155 = sphi 0, %s154
      %s171 = sphi 0, %s155
      %s177 = sphi 0, %s179
      %s180 = sphi 0, %s177
      %s181 = sphi 0, %s180
      %s197 = sphi 0, %s181
    $region4: #{tpu_custom_call.1} parent=1 // loop_header_branch
      %29 = sbr.rel (%p27) target = $region8
    $region5: #{tpu_custom_call.1} parent=1 // loop_body
      %s31 = ssub.s32 %s26, 1
      %s32 = ssub.s32 %s26, 2
      %s33 = sadd.s32 %s26, 1
      %s34 = ssub.s32 %s26, %s33
      %p35 = scmp.eq.s32.totalorder %s34, 0
      %s37 = sadd.s32 %s36, 1
      %s38 = scalar_select %p35, %s36, %s37
      %p41 = pneg %p35
      %p42 = scmp.eq.s32.totalorder %s26, 1
      %p43 = por %p41, %p42
      %p44 = scmp.ne.s32.totalorder %s36, %s39
      %p45 = scmp.eq.s32.totalorder %s26, 0
      %p46 = por %p44, %p45
      %p47 = scmp.ne.s32.totalorder %s36, %s39
      %p48 = scmp.eq.s32.totalorder %s31, 1
      %p49 = por %p47, %p48
      %p50 = scmp.ne.s32.totalorder %s39, %s40
      %p51 = scmp.eq.s32.totalorder %s31, 0
      %p52 = por %p50, %p51
      %p53 = scmp.ne.s32.totalorder %s39, %s40
      %p54 = scmp.eq.s32.totalorder %s32, 1
      %p55 = por %p53, %p54
      %p57 = scmp.ne.s32.totalorder %s40, %s56
      %p58 = scmp.eq.s32.totalorder %s32, 0
      %p59 = por %p57, %p58
      %s60 = ssub.s32 %s26, %s33
      %p61 = scmp.eq.s32.totalorder %s60, 0
      %s63 = sadd.s32 %s62, 1
      %s64 = scalar_select %p61, %s62, %s63
      %p67 = pneg %p61
      %p68 = scmp.eq.s32.totalorder %s26, 1
      %p69 = por %p67, %p68
      %p70 = scmp.ne.s32.totalorder %s62, %s65
      %p71 = scmp.eq.s32.totalorder %s26, 0
      %p72 = por %p70, %p71
      %p73 = scmp.ne.s32.totalorder %s62, %s65
      %p74 = scmp.eq.s32.totalorder %s31, 1
      %p75 = por %p73, %p74
      %p76 = scmp.ne.s32.totalorder %s65, %s66
      %p77 = scmp.eq.s32.totalorder %s31, 0
      %p78 = por %p76, %p77
      %p79 = scmp.ne.s32.totalorder %s65, %s66
      %p80 = scmp.eq.s32.totalorder %s32, 1
      %p81 = por %p79, %p80
      %p83 = scmp.ne.s32.totalorder %s66, %s82
      %p84 = scmp.eq.s32.totalorder %s32, 0
      %p85 = por %p83, %p84
      %s87 = sadd.s32 %s86, 1
      %p90 = scmp.eq.s32.totalorder %s26, 1
      %p91 = scmp.ne.s32.totalorder %s86, %s88
      %p92 = scmp.eq.s32.totalorder %s26, 0
      %p93 = por %p91, %p92
      %p94 = scmp.ne.s32.totalorder %s86, %s88
      %p95 = scmp.eq.s32.totalorder %s31, 1
      %p96 = por %p94, %p95
      %p97 = scmp.ne.s32.totalorder %s88, %s89
      %p98 = scmp.eq.s32.totalorder %s31, 0
      %p99 = por %p97, %p98
      %p100 = scmp.ne.s32.totalorder %s88, %s89
      %p101 = scmp.eq.s32.totalorder %s32, 1
      %p102 = por %p100, %p101
      %p104 = scmp.ne.s32.totalorder %s89, %s103
      %p105 = scmp.eq.s32.totalorder %s32, 0
      %p106 = por %p104, %p105
      %s108 = sadd.s32 %s107, 1
      %p111 = scmp.eq.s32.totalorder %s26, 1
      %p112 = scmp.ne.s32.totalorder %s107, %s109
      %p113 = scmp.eq.s32.totalorder %s26, 0
      %p114 = por %p112, %p113
      %p115 = scmp.ne.s32.totalorder %s107, %s109
      %p116 = scmp.eq.s32.totalorder %s31, 1
      %p117 = por %p115, %p116
      %p118 = scmp.ne.s32.totalorder %s109, %s110
      %p119 = scmp.eq.s32.totalorder %s31, 0
      %p120 = por %p118, %p119
      %p121 = scmp.ne.s32.totalorder %s109, %s110
      %p122 = scmp.eq.s32.totalorder %s32, 1
      %p123 = por %p121, %p122
      %p125 = scmp.ne.s32.totalorder %s110, %s124
      %p126 = scmp.eq.s32.totalorder %s32, 0
      %p127 = por %p125, %p126
      %s129 = sadd.s32 %s128, 1
      %p132 = scmp.eq.s32.totalorder %s26, 1
      %p133 = scmp.ne.s32.totalorder %s128, %s130
      %p134 = scmp.eq.s32.totalorder %s26, 0
      %p135 = por %p133, %p134
      %p136 = scmp.ne.s32.totalorder %s128, %s130
      %p137 = scmp.eq.s32.totalorder %s31, 1
      %p138 = por %p136, %p137
      %p139 = scmp.ne.s32.totalorder %s130, %s131
      %p140 = scmp.eq.s32.totalorder %s31, 0
      %p141 = por %p139, %p140
      %p142 = scmp.ne.s32.totalorder %s130, %s131
      %p143 = scmp.eq.s32.totalorder %s32, 1
      %p144 = por %p142, %p143
      %p146 = scmp.ne.s32.totalorder %s131, %s145
      %p147 = scmp.eq.s32.totalorder %s32, 0
      %p148 = por %p146, %p147
      %s149 = ssub.s32 %s26, %s33
      %p150 = scmp.eq.s32.totalorder %s149, 0
      %s152 = sadd.s32 %s151, 1
      %s153 = scalar_select %p150, %s151, %s152
      %p156 = pneg %p150
      %p157 = scmp.eq.s32.totalorder %s26, 1
      %p158 = por %p156, %p157
      %p159 = scmp.ne.s32.totalorder %s151, %s154
      %p160 = scmp.eq.s32.totalorder %s26, 0
      %p161 = por %p159, %p160
      %p162 = scmp.ne.s32.totalorder %s151, %s154
      %p163 = scmp.eq.s32.totalorder %s31, 1
      %p164 = por %p162, %p163
      %p165 = scmp.ne.s32.totalorder %s154, %s155
      %p166 = scmp.eq.s32.totalorder %s31, 0
      %p167 = por %p165, %p166
      %p168 = scmp.ne.s32.totalorder %s154, %s155
      %p169 = scmp.eq.s32.totalorder %s32, 1
      %p170 = por %p168, %p169
      %p172 = scmp.ne.s32.totalorder %s155, %s171
      %p173 = scmp.eq.s32.totalorder %s32, 0
      %p174 = por %p172, %p173
      %s175 = ssub.s32 %s26, %s33
      %p176 = scmp.eq.s32.totalorder %s175, 0
      %s178 = sadd.s32 %s177, 1
      %s179 = scalar_select %p176, %s177, %s178
      %p182 = pneg %p176
      %p183 = scmp.eq.s32.totalorder %s26, 1
      %p184 = por %p182, %p183
      %p185 = scmp.ne.s32.totalorder %s177, %s180
      %p186 = scmp.eq.s32.totalorder %s26, 0
      %p187 = por %p185, %p186
      %p188 = scmp.ne.s32.totalorder %s177, %s180
      %p189 = scmp.eq.s32.totalorder %s31, 1
      %p190 = por %p188, %p189
      %p191 = scmp.ne.s32.totalorder %s180, %s181
      %p192 = scmp.eq.s32.totalorder %s31, 0
      %p193 = por %p191, %p192
      %p194 = scmp.ne.s32.totalorder %s180, %s181
      %p195 = scmp.eq.s32.totalorder %s32, 1
      %p196 = por %p194, %p195
      %p198 = scmp.ne.s32.totalorder %s181, %s197
      %p199 = scmp.eq.s32.totalorder %s32, 0
      %p200 = por %p198, %p199
      %p201 = scmp.le.s32.totalorder 1, %s26
      %p202 = scmp.lt.s32.totalorder %s26, 3
      %p203 = pnand %p201, %p202
      %p204 = pneg %p203
      // Predicated region
      $region9: #{tpu_custom_call.1} parent=5 // pred_check
        _
      $region10: #{tpu_custom_call.1} parent=5 // pred_check_branch
        %206 = sbr.rel (%p203) target = $region12
      $region11: #{tpu_custom_call.1} parent=5 // pred_region
        %s207 = ssub.s32 %s26, 1
        // Predicated region
        $region13: #{tpu_custom_call.1} parent=11 // pred_check
          %p208 = pneg %p99
        $region14: #{tpu_custom_call.1} parent=11 // pred_check_branch
          %210 = sbr.rel (%p208) target = $region16
        $region15: #{tpu_custom_call.1} parent=11 // pred_region
          %s212 = ssub.s32 2048, 2048
          %213 = vsyncadd [#allocation6], %s212
          %s214 = sshll.u32 [#allocation7], 4
          %s215 = int_to_ptr.vmem [resolvable:$true] %s214
          %220 = dma.hbm_to_vmem [thread:$0]  %s2, 2048, %s215, [#allocation6], 128, 128, 8
        $region16: #{tpu_custom_call.1} parent=11 // pred_fallthru
          _
        // Predicated region
        $region17: #{tpu_custom_call.1} parent=11 // pred_check
          %p221 = pneg %p120
        $region18: #{tpu_custom_call.1} parent=11 // pred_check_branch
          %223 = sbr.rel (%p221) target = $region20
        $region19: #{tpu_custom_call.1} parent=11 // pred_region
          %s225 = ssub.s32 2048, 2048
          %226 = vsyncadd [#allocation9], %s225
          %s227 = sshll.u32 [#allocation8], 4
          %s228 = int_to_ptr.vmem [resolvable:$true] %s227
          %233 = dma.hbm_to_vmem [thread:$0]  %s3, 2048, %s228, [#allocation9], 128, 128, 8
        $region20: #{tpu_custom_call.1} parent=11 // pred_fallthru
          _
        // Predicated region
        $region21: #{tpu_custom_call.1} parent=11 // pred_check
          %p234 = pneg %p141
        $region22: #{tpu_custom_call.1} parent=11 // pred_check_branch
          %236 = sbr.rel (%p234) target = $region24
        $region23: #{tpu_custom_call.1} parent=11 // pred_region
          %s238 = ssub.s32 2048, 2048
          %239 = vsyncadd [#allocation9], %s238
          %s240 = sshll.u32 [#allocation10], 4
          %s241 = int_to_ptr.vmem [resolvable:$true] %s240
          %246 = dma.hbm_to_vmem [thread:$0]  %s4, 2048, %s241, [#allocation9], 128, 128, 8
        $region24: #{tpu_custom_call.1} parent=11 // pred_fallthru
          _
      $region12: #{tpu_custom_call.1} parent=5 // pred_fallthru
        _
      %p247 = scmp.lt.s32.totalorder %s26, 2
      // Predicated region
      $region25: #{tpu_custom_call.1} parent=5 // pred_check
        %p248 = pneg %p247
      $region26: #{tpu_custom_call.1} parent=5 // pred_check_branch
        %250 = sbr.rel (%p248) target = $region28
      $region27: #{tpu_custom_call.1} parent=5 // pred_region
        // Predicated region
        $region29: #{tpu_custom_call.1} parent=27 // pred_check
          %p251 = pneg %p46
        $region30: #{tpu_custom_call.1} parent=27 // pred_check_branch
          %253 = sbr.rel (%p251) target = $region32
        $region31: #{tpu_custom_call.1} parent=27 // pred_region
          %s254 = sand.u32 %s36, 1
          %s255 = scalar_lea.sflag [#allocation3], %s254
          %s256 = sand.u32 %s36, 1
          %s257 = smul.addr %s256, 8
          %s258 = scalar_lea.vmem [#allocation2], %s257
          %s260 = ssub.s32 128, 128
          %261 = vsyncadd %s255, %s260
          %s262 = smul.addr %s26, 128
          %s263 = scalar_lea.hbm %s0, %s262
          %s265 = sshll.u32 %s258, 4
          %s266 = int_to_ptr.vmem [resolvable:$true] %s265
          %268 = dma.hbm_to_vmem [thread:$0]  %s263, 128, %s266, %s255
        $region32: #{tpu_custom_call.1} parent=27 // pred_fallthru
          _
        // Predicated region
        $region33: #{tpu_custom_call.1} parent=27 // pred_check
          %p269 = pneg %p72
        $region34: #{tpu_custom_call.1} parent=27 // pred_check_branch
          %271 = sbr.rel (%p269) target = $region36
        $region35: #{tpu_custom_call.1} parent=27 // pred_region
          %s272 = sand.u32 %s26, 1
          %s273 = scalar_lea.sflag [#allocation6], %s272
          %s274 = sand.u32 %s62, 1
          %s275 = smul.addr %s274, 128
          %s276 = scalar_lea.vmem [#allocation5], %s275
          %s278 = ssub.s32 2048, 2048
          %279 = vsyncadd %s273, %s278
          %s280 = smul.addr %s26, 16
          %s281 = smul.addr %s280, 128
          %s282 = scalar_lea.hbm %s1, %s281
          %s283 = sshll.u32 %s276, 4
          %s284 = int_to_ptr.vmem [resolvable:$true] %s283
          %289 = dma.hbm_to_vmem [thread:$0]  %s282, 2048, %s284, %s273, 128, 128, 8
        $region36: #{tpu_custom_call.1} parent=27 // pred_fallthru
          _
      $region28: #{tpu_custom_call.1} parent=5 // pred_fallthru
        _
      %p290 = scmp.le.s32.totalorder 1, %s26
      %p291 = scmp.lt.s32.totalorder %s26, 3
      %p292 = pnand %p290, %p291
      %p293 = pneg %p292
      // Predicated region
      $region37: #{tpu_custom_call.1} parent=5 // pred_check
        _
      $region38: #{tpu_custom_call.1} parent=5 // pred_check_branch
        %295 = sbr.rel (%p292) target = $region40
      $region39: #{tpu_custom_call.1} parent=5 // pred_region
        %s296 = ssub.s32 %s26, 1
        %s297 = sand.u32 %s39, 1
        %s298 = scalar_lea.sflag [#allocation3], %s297
        %s299 = sand.u32 %s39, 1
        %s300 = smul.addr %s299, 8
        %s301 = scalar_lea.vmem [#allocation2], %s300
        // Predicated region
        $region41: #{tpu_custom_call.1} parent=39 // pred_check
          %p302 = pneg %p52
        $region42: #{tpu_custom_call.1} parent=39 // pred_check_branch
          %304 = sbr.rel (%p302) target = $region44
        $region43: #{tpu_custom_call.1} parent=39 // pred_region
          %305 = dma.done %s298, 128
        $region44: #{tpu_custom_call.1} parent=39 // pred_fallthru
          _
        %s306 = sand.u32 %s31, 1
        %s307 = scalar_lea.sflag [#allocation6], %s306
        %s308 = sand.u32 %s65, 1
        %s309 = smul.addr %s308, 128
        %s310 = scalar_lea.vmem [#allocation5], %s309
        // Predicated region
        $region45: #{tpu_custom_call.1} parent=39 // pred_check
          %p311 = pneg %p78
        $region46: #{tpu_custom_call.1} parent=39 // pred_check_branch
          %313 = sbr.rel (%p311) target = $region48
        $region47: #{tpu_custom_call.1} parent=39 // pred_region
          %314 = dma.done %s307, 2048
        $region48: #{tpu_custom_call.1} parent=39 // pred_fallthru
          _
        // Predicated region
        $region49: #{tpu_custom_call.1} parent=39 // pred_check
          %p315 = pneg %p99
        $region50: #{tpu_custom_call.1} parent=39 // pred_check_branch
          %317 = sbr.rel (%p315) target = $region52
        $region51: #{tpu_custom_call.1} parent=39 // pred_region
          %318 = dma.done [#allocation6], 2048
        $region52: #{tpu_custom_call.1} parent=39 // pred_fallthru
          _
        // Predicated region
        $region53: #{tpu_custom_call.1} parent=39 // pred_check
          %p319 = pneg %p120
        $region54: #{tpu_custom_call.1} parent=39 // pred_check_branch
          %321 = sbr.rel (%p319) target = $region56
        $region55: #{tpu_custom_call.1} parent=39 // pred_region
          %322 = dma.done [#allocation9], 2048
        $region56: #{tpu_custom_call.1} parent=39 // pred_fallthru
          _
        // Predicated region
        $region57: #{tpu_custom_call.1} parent=39 // pred_check
          %p323 = pneg %p141
        $region58: #{tpu_custom_call.1} parent=39 // pred_check_branch
          %325 = sbr.rel (%p323) target = $region60
        $region59: #{tpu_custom_call.1} parent=39 // pred_region
          %326 = dma.done [#allocation9], 2048
        $region60: #{tpu_custom_call.1} parent=39 // pred_fallthru
          _
        %s327 = sand.u32 %s39, 1
        %s328 = scalar_lea.sflag [#allocation3], %s327
        %s329 = sand.u32 %s39, 1
        %s330 = smul.addr %s329, 8
        %s331 = scalar_lea.vmem [#allocation2], %s330
        %p332 = pneg %p52
        %p333 = pneg %p49
        %s334 = sand.u32 %s31, 1
        %s335 = scalar_lea.sflag [#allocation6], %s334
        %s336 = sand.u32 %s65, 1
        %s337 = smul.addr %s336, 128
        %s338 = scalar_lea.vmem [#allocation5], %s337
        %p339 = pneg %p78
        %p340 = pneg %p75
        %p341 = pneg %p99
        %p342 = pneg %p96
        %p343 = pneg %p120
        %p344 = pneg %p117
        %p345 = pneg %p141
        %p346 = pneg %p138
        %p347 = pneg %p167
        %p348 = pneg %p164
        %s349 = sand.u32 %s154, 1
        %s350 = scalar_lea.sflag [#allocation4], %s349
        %s351 = sand.u32 %s154, 1
        %s352 = smul.addr %s351, 8
        %s353 = scalar_lea.vmem [#allocation11], %s352
        %p354 = pneg %p193
        %p355 = pneg %p190
        %s356 = sand.u32 %s180, 1
        %s357 = scalar_lea.sflag [#allocation13], %s356
        %s358 = sand.u32 %s180, 1
        %s359 = smul.addr %s358, 8
        %s360 = scalar_lea.vmem [#allocation12], %s359
        %v361 = vld [vmem:[%s301] sm:$0xff]
        %v362 = vld [vmem:[%s310] sm:$0xff]
        %v363 = vld [vmem:[%s310 + $0x8] sm:$0xff]
        %v364 = vld [vmem:[%s310 + $0x10] sm:$0xff]
        %v365 = vld [vmem:[%s310 + $0x18] sm:$0xff]
        %v366 = vld [vmem:[%s310 + $0x20] sm:$0xff]
        %v367 = vld [vmem:[%s310 + $0x28] sm:$0xff]
        %v368 = vld [vmem:[%s310 + $0x30] sm:$0xff]
        %v369 = vld [vmem:[%s310 + $0x38] sm:$0xff]
        %v370 = vld [vmem:[%s310 + $0x40] sm:$0xff]
        %v371 = vld [vmem:[%s310 + $0x48] sm:$0xff]
        %v372 = vld [vmem:[%s310 + $0x50] sm:$0xff]
        %v373 = vld [vmem:[%s310 + $0x58] sm:$0xff]
        %v374 = vld [vmem:[%s310 + $0x60] sm:$0xff]
        %v375 = vld [vmem:[%s310 + $0x68] sm:$0xff]
        %v376 = vld [vmem:[%s310 + $0x70] sm:$0xff]
        %v377 = vld [vmem:[%s310 + $0x78] sm:$0xff]
        %v378 = vld [vmem:[#allocation7] sm:$0xff]
        %v379 = vld [vmem:[#allocation7 + $0x8] sm:$0xff]
        %v380 = vld [vmem:[#allocation7 + $0x10] sm:$0xff]
        %v381 = vld [vmem:[#allocation7 + $0x18] sm:$0xff]
        %v382 = vld [vmem:[#allocation7 + $0x20] sm:$0xff]
        %v383 = vld [vmem:[#allocation7 + $0x28] sm:$0xff]
        %v384 = vld [vmem:[#allocation7 + $0x30] sm:$0xff]
        %v385 = vld [vmem:[#allocation7 + $0x38] sm:$0xff]
        %v386 = vld [vmem:[#allocation7 + $0x40] sm:$0xff]
        %v387 = vld [vmem:[#allocation7 + $0x48] sm:$0xff]
        %v388 = vld [vmem:[#allocation7 + $0x50] sm:$0xff]
        %v389 = vld [vmem:[#allocation7 + $0x58] sm:$0xff]
        %v390 = vld [vmem:[#allocation7 + $0x60] sm:$0xff]
        %v391 = vld [vmem:[#allocation7 + $0x68] sm:$0xff]
        %v392 = vld [vmem:[#allocation7 + $0x70] sm:$0xff]
        %v393 = vld [vmem:[#allocation7 + $0x78] sm:$0xff]
        %394 = vmatprep.subr.mxu0 0.0
        %395 = vmatpush1.msra.mxu0 %v393
        %396 = vmatprep.subr.mxu0 0.0
        %397 = vmatpush1.msra.mxu0 %v392
        %398 = vmatprep.subr.mxu0 0.0
        %399 = vmatpush1.msra.mxu0 %v391
        %400 = vmatprep.subr.mxu0 0.0
        %401 = vmatpush1.msra.mxu0 %v390
        %402 = vmatprep.subr.mxu0 0.0
        %403 = vmatpush1.msra.mxu0 %v389
        %404 = vmatprep.subr.mxu0 0.0
        %405 = vmatpush1.msra.mxu0 %v388
        %406 = vmatprep.subr.mxu0 0.0
        %407 = vmatpush1.msra.mxu0 %v387
        %408 = vmatprep.subr.mxu0 0.0
        %409 = vmatpush1.msra.mxu0 %v386
        %410 = vmatprep.subr.mxu0 0.0
        %411 = vmatpush1.msra.mxu0 %v385
        %412 = vmatprep.subr.mxu0 0.0
        %413 = vmatpush1.msra.mxu0 %v384
        %414 = vmatprep.subr.mxu0 0.0
        %415 = vmatpush1.msra.mxu0 %v383
        %416 = vmatprep.subr.mxu0 0.0
        %417 = vmatpush1.msra.mxu0 %v382
        %418 = vmatprep.subr.mxu0 0.0
        %419 = vmatpush1.msra.mxu0 %v381
        %420 = vmatprep.subr.mxu0 0.0
        %421 = vmatpush1.msra.mxu0 %v380
        %422 = vmatprep.subr.mxu0 0.0
        %423 = vmatpush1.msra.mxu0 %v379
        %424 = vmatprep.subr.mxu0 0.0
        %425 = vmatpush1.msra.mxu0 %v378
        %426 = vmatprep.subr.mxu0 0.0
        %427 = vmatpush2.msra.mxu0 0.0
        %428 = vmatprep.subr.mxu0 0.0
        %429 = vmatpush2.msra.mxu0 0.0
        %430 = vmatprep.subr.mxu0 0.0
        %431 = vmatpush2.msra.mxu0 0.0
        %432 = vmatprep.subr.mxu0 0.0
        %433 = vmatpush2.msra.mxu0 0.0
        %434 = vmatprep.subr.mxu0 0.0
        %435 = vmatpush2.msra.mxu0 0.0
        %436 = vmatprep.subr.mxu0 0.0
        %437 = vmatpush2.msra.mxu0 0.0
        %438 = vmatprep.subr.mxu0 0.0
        %439 = vmatpush2.msra.mxu0 0.0
        %440 = vmatprep.subr.mxu0 0.0
        %441 = vmatpush2.msra.mxu0 0.0
        %442 = vmatprep.subr.mxu0 0.0
        %443 = vmatpush2.msra.mxu0 0.0
        %444 = vmatprep.subr.mxu0 0.0
        %445 = vmatpush2.msra.mxu0 0.0
        %446 = vmatprep.subr.mxu0 0.0
        %447 = vmatpush2.msra.mxu0 0.0
        %448 = vmatprep.subr.mxu0 0.0
        %449 = vmatpush2.msra.mxu0 0.0
        %450 = vmatprep.subr.mxu0 0.0
        %451 = vmatpush2.msra.mxu0 0.0
        %452 = vmatprep.subr.mxu0 0.0
        %453 = vmatpush2.msra.mxu0 0.0
        %454 = vmatprep.subr.mxu0 0.0
        %455 = vmatpush2.msra.mxu0 0.0
        %456 = vmatprep.subr.mxu0 0.0
        %457 = vmatpush2.msra.mxu0 0.0
        %458 = vmatprep.mubr.f32.mxu0 0.0
        %459 = vmatmul.mubr.f32.gmra.mxu0 %v361
        %v460 = vpop.f32.mrf.mxu0
        %v461 = vadd.f32 0.0, %v460
        %v462 = vpop.f32.mrf.mxu0
        %463 = vdwg.mxu0
        %464 = vmatprep.subr.mxu0 0.0
        %465 = vmatpush1.xpose.msra.mxu0 %v377
        %466 = vmatprep.subr.mxu0 0.0
        %467 = vmatpush1.xpose.msra.mxu0 %v376
        %468 = vmatprep.subr.mxu0 0.0
        %469 = vmatpush1.xpose.msra.mxu0 %v375
        %470 = vmatprep.subr.mxu0 0.0
        %471 = vmatpush1.xpose.msra.mxu0 %v374
        %472 = vmatprep.subr.mxu0 0.0
        %473 = vmatpush1.xpose.msra.mxu0 %v373
        %474 = vmatprep.subr.mxu0 0.0
        %475 = vmatpush1.xpose.msra.mxu0 %v372
        %476 = vmatprep.subr.mxu0 0.0
        %477 = vmatpush1.xpose.msra.mxu0 %v371
        %478 = vmatprep.subr.mxu0 0.0
        %479 = vmatpush1.xpose.msra.mxu0 %v370
        %480 = vmatprep.subr.mxu0 0.0
        %481 = vmatpush1.xpose.msra.mxu0 %v369
        %482 = vmatprep.subr.mxu0 0.0
        %483 = vmatpush1.xpose.msra.mxu0 %v368
        %484 = vmatprep.subr.mxu0 0.0
        %485 = vmatpush1.xpose.msra.mxu0 %v367
        %486 = vmatprep.subr.mxu0 0.0
        %487 = vmatpush1.xpose.msra.mxu0 %v366
        %488 = vmatprep.subr.mxu0 0.0
        %489 = vmatpush1.xpose.msra.mxu0 %v365
        %490 = vmatprep.subr.mxu0 0.0
        %491 = vmatpush1.xpose.msra.mxu0 %v364
        %492 = vmatprep.subr.mxu0 0.0
        %493 = vmatpush1.xpose.msra.mxu0 %v363
        %494 = vmatprep.subr.mxu0 0.0
        %495 = vmatpush1.xpose.msra.mxu0 %v362
        %496 = vmatprep.subr.mxu0 0.0
        %497 = vmatpush2.xpose.msra.mxu0 0.0
        %498 = vmatprep.subr.mxu0 0.0
        %499 = vmatpush2.xpose.msra.mxu0 0.0
        %500 = vmatprep.subr.mxu0 0.0
        %501 = vmatpush2.xpose.msra.mxu0 0.0
        %502 = vmatprep.subr.mxu0 0.0
        %503 = vmatpush2.xpose.msra.mxu0 0.0
        %504 = vmatprep.subr.mxu0 0.0
        %505 = vmatpush2.xpose.msra.mxu0 0.0
        %506 = vmatprep.subr.mxu0 0.0
        %507 = vmatpush2.xpose.msra.mxu0 0.0
        %508 = vmatprep.subr.mxu0 0.0
        %509 = vmatpush2.xpose.msra.mxu0 0.0
        %510 = vmatprep.subr.mxu0 0.0
        %511 = vmatpush2.xpose.msra.mxu0 0.0
        %512 = vmatprep.subr.mxu0 0.0
        %513 = vmatpush2.xpose.msra.mxu0 0.0
        %514 = vmatprep.subr.mxu0 0.0
        %515 = vmatpush2.xpose.msra.mxu0 0.0
        %516 = vmatprep.subr.mxu0 0.0
        %517 = vmatpush2.xpose.msra.mxu0 0.0
        %518 = vmatprep.subr.mxu0 0.0
        %519 = vmatpush2.xpose.msra.mxu0 0.0
        %520 = vmatprep.subr.mxu0 0.0
        %521 = vmatpush2.xpose.msra.mxu0 0.0
        %522 = vmatprep.subr.mxu0 0.0
        %523 = vmatpush2.xpose.msra.mxu0 0.0
        %524 = vmatprep.subr.mxu0 0.0
        %525 = vmatpush2.xpose.msra.mxu0 0.0
        %526 = vmatprep.subr.mxu0 0.0
        %527 = vmatpush2.xpose.msra.mxu0 0.0
        %528 = vmatprep.mubr.f32.mxu0 0.0
        %529 = vmatmul.mubr.f32.gmra.mxu0 %v461
        %v530 = vpop.f32.mrf.mxu0
        %v531 = vadd.f32 0.0, %v530
        %v532 = vpop.f32.mrf.mxu0
        %533 = vdwg.mxu0
        %v534 = vlaneseq
        %v535 = vand.u32 %v534, 127
        %vm536 = vcmp.lt.s32.totalorder %v535, 8
        %v537 = vsel %vm536, %v531, -1e+30
        %538 = vmax.xlane.f32.xlu0 %v537
        %v539 = vpop.xlane.xlu0 %538
        %v540 = vsub.f32 %v537, %v539
        loop: start=0, step=1, limit=30
        $region61: #{tpu_custom_call.1} parent=39 // loop_pre_header
          _
        $region62: #{tpu_custom_call.1} parent=39 // loop_header
          %s542 = sphi 0, %s546
          %p543 = scmp.ge.s32.totalorder %s542, 30
          %v547 = vphi -1.0, %v556
          %v548 = vphi 0.0, %v557
        $region63: #{tpu_custom_call.1} parent=39 // loop_header_branch
          %545 = sbr.rel (%p543) target = $region67
        $region64: #{tpu_custom_call.1} parent=39 // loop_body
          %v549 = vadd.f32 %v547, %v548
          %v550 = vmul.f32 %v549, 0.5
          %v551 = vsub.f32 %v540, %v550
          %v552 = vmax.f32 %v551, 0.0
          %553 = vadd.xlane.f32.xlu0 %v552
          %v554 = vpop.xlane.xlu0 %553
          %vm555 = vcmp.ge.f32.partialorder %v554, 1.0
          %v556 = vsel %vm555, %v550, %v547
          %v557 = vsel %vm555, %v548, %v550
        $region65: #{tpu_custom_call.1} parent=39 // loop_footer
          %s546 = sadd.s32 1, %s542
        $region66: #{tpu_custom_call.1} parent=39 // loop_footer_branch
          %541 = sbr.rel target = $region62
        $region67: #{tpu_custom_call.1} parent=39 // loop_exit
          _
        %vm558 = vcmp.gt.f32.partialorder %v540, %v547
        %v559 = vsel %vm558, 1, 0
        %v560 = vcvt.s32.f32 %v559
        %561 = vadd.xlane.f32.xlu0 %v560
        %v562 = vpop.xlane.xlu0 %561
        %v563 = vmul.f32 %v560, %v540
        %564 = vadd.xlane.f32.xlu0 %v563
        %v565 = vpop.xlane.xlu0 %564
        %v566 = vsub.f32 %v565, 1.0
        %v567 = vrcp.pop %v562
        %v568 = vmul.f32 %v566, %v567
        %v569 = vsub.f32 %v540, %v568
        %v570 = vmax.f32 %v569, 0.0
        %571 = vmatprep.subr.mxu0 0.0
        %572 = vmatpush1.msra.mxu0 %v377
        %573 = vmatprep.subr.mxu0 0.0
        %574 = vmatpush1.msra.mxu0 %v376
        %575 = vmatprep.subr.mxu0 0.0
        %576 = vmatpush1.msra.mxu0 %v375
        %577 = vmatprep.subr.mxu0 0.0
        %578 = vmatpush1.msra.mxu0 %v374
        %579 = vmatprep.subr.mxu0 0.0
        %580 = vmatpush1.msra.mxu0 %v373
        %581 = vmatprep.subr.mxu0 0.0
        %582 = vmatpush1.msra.mxu0 %v372
        %583 = vmatprep.subr.mxu0 0.0
        %584 = vmatpush1.msra.mxu0 %v371
        %585 = vmatprep.subr.mxu0 0.0
        %586 = vmatpush1.msra.mxu0 %v370
        %587 = vmatprep.subr.mxu0 0.0
        %588 = vmatpush1.msra.mxu0 %v369
        %589 = vmatprep.subr.mxu0 0.0
        %590 = vmatpush1.msra.mxu0 %v368
        %591 = vmatprep.subr.mxu0 0.0
        %592 = vmatpush1.msra.mxu0 %v367
        %593 = vmatprep.subr.mxu0 0.0
        %594 = vmatpush1.msra.mxu0 %v366
        %595 = vmatprep.subr.mxu0 0.0
        %596 = vmatpush1.msra.mxu0 %v365
        %597 = vmatprep.subr.mxu0 0.0
        %598 = vmatpush1.msra.mxu0 %v364
        %599 = vmatprep.subr.mxu0 0.0
        %600 = vmatpush1.msra.mxu0 %v363
        %601 = vmatprep.subr.mxu0 0.0
        %602 = vmatpush1.msra.mxu0 %v362
        %603 = vmatprep.subr.mxu0 0.0
        %604 = vmatpush2.msra.mxu0 0.0
        %605 = vmatprep.subr.mxu0 0.0
        %606 = vmatpush2.msra.mxu0 0.0
        %607 = vmatprep.subr.mxu0 0.0
        %608 = vmatpush2.msra.mxu0 0.0
        %609 = vmatprep.subr.mxu0 0.0
        %610 = vmatpush2.msra.mxu0 0.0
        %611 = vmatprep.subr.mxu0 0.0
        %612 = vmatpush2.msra.mxu0 0.0
        %613 = vmatprep.subr.mxu0 0.0
        %614 = vmatpush2.msra.mxu0 0.0
        %615 = vmatprep.subr.mxu0 0.0
        %616 = vmatpush2.msra.mxu0 0.0
        %617 = vmatprep.subr.mxu0 0.0
        %618 = vmatpush2.msra.mxu0 0.0
        %619 = vmatprep.subr.mxu0 0.0
        %620 = vmatpush2.msra.mxu0 0.0
        %621 = vmatprep.subr.mxu0 0.0
        %622 = vmatpush2.msra.mxu0 0.0
        %623 = vmatprep.subr.mxu0 0.0
        %624 = vmatpush2.msra.mxu0 0.0
        %625 = vmatprep.subr.mxu0 0.0
        %626 = vmatpush2.msra.mxu0 0.0
        %627 = vmatprep.subr.mxu0 0.0
        %628 = vmatpush2.msra.mxu0 0.0
        %629 = vmatprep.subr.mxu0 0.0
        %630 = vmatpush2.msra.mxu0 0.0
        %631 = vmatprep.subr.mxu0 0.0
        %632 = vmatpush2.msra.mxu0 0.0
        %633 = vmatprep.subr.mxu0 0.0
        %634 = vmatpush2.msra.mxu0 0.0
        %635 = vmatprep.mubr.f32.mxu0 0.0
        %636 = vmatmul.mubr.f32.gmra.mxu0 %v570
        %v637 = vpop.f32.mrf.mxu0
        %v638 = vadd.f32 0.0, %v637
        %v639 = vpop.f32.mrf.mxu0
        %640 = vdwg.mxu0
        %v641 = vld [vmem:[#allocation8] sm:$0xff]
        %v642 = vld [vmem:[#allocation8 + $0x8] sm:$0xff]
        %v643 = vld [vmem:[#allocation8 + $0x10] sm:$0xff]
        %v644 = vld [vmem:[#allocation8 + $0x18] sm:$0xff]
        %v645 = vld [vmem:[#allocation8 + $0x20] sm:$0xff]
        %v646 = vld [vmem:[#allocation8 + $0x28] sm:$0xff]
        %v647 = vld [vmem:[#allocation8 + $0x30] sm:$0xff]
        %v648 = vld [vmem:[#allocation8 + $0x38] sm:$0xff]
        %v649 = vld [vmem:[#allocation8 + $0x40] sm:$0xff]
        %v650 = vld [vmem:[#allocation8 + $0x48] sm:$0xff]
        %v651 = vld [vmem:[#allocation8 + $0x50] sm:$0xff]
        %v652 = vld [vmem:[#allocation8 + $0x58] sm:$0xff]
        %v653 = vld [vmem:[#allocation8 + $0x60] sm:$0xff]
        %v654 = vld [vmem:[#allocation8 + $0x68] sm:$0xff]
        %v655 = vld [vmem:[#allocation8 + $0x70] sm:$0xff]
        %v656 = vld [vmem:[#allocation8 + $0x78] sm:$0xff]
        %v657 = vld [vmem:[#allocation10] sm:$0xff]
        %v658 = vld [vmem:[#allocation10 + $0x8] sm:$0xff]
        %v659 = vld [vmem:[#allocation10 + $0x10] sm:$0xff]
        %v660 = vld [vmem:[#allocation10 + $0x18] sm:$0xff]
        %v661 = vld [vmem:[#allocation10 + $0x20] sm:$0xff]
        %v662 = vld [vmem:[#allocation10 + $0x28] sm:$0xff]
        %v663 = vld [vmem:[#allocation10 + $0x30] sm:$0xff]
        %v664 = vld [vmem:[#allocation10 + $0x38] sm:$0xff]
        %v665 = vld [vmem:[#allocation10 + $0x40] sm:$0xff]
        %v666 = vld [vmem:[#allocation10 + $0x48] sm:$0xff]
        %v667 = vld [vmem:[#allocation10 + $0x50] sm:$0xff]
        %v668 = vld [vmem:[#allocation10 + $0x58] sm:$0xff]
        %v669 = vld [vmem:[#allocation10 + $0x60] sm:$0xff]
        %v670 = vld [vmem:[#allocation10 + $0x68] sm:$0xff]
        %v671 = vld [vmem:[#allocation10 + $0x70] sm:$0xff]
        %v672 = vld [vmem:[#allocation10 + $0x78] sm:$0xff]
        %673 = vmatprep.subr.mxu0 0.0
        %674 = vmatpush1.msra.mxu0 %v672
        %675 = vmatprep.subr.mxu0 0.0
        %676 = vmatpush1.msra.mxu0 %v671
        %677 = vmatprep.subr.mxu0 0.0
        %678 = vmatpush1.msra.mxu0 %v670
        %679 = vmatprep.subr.mxu0 0.0
        %680 = vmatpush1.msra.mxu0 %v669
        %681 = vmatprep.subr.mxu0 0.0
        %682 = vmatpush1.msra.mxu0 %v668
        %683 = vmatprep.subr.mxu0 0.0
        %684 = vmatpush1.msra.mxu0 %v667
        %685 = vmatprep.subr.mxu0 0.0
        %686 = vmatpush1.msra.mxu0 %v666
        %687 = vmatprep.subr.mxu0 0.0
        %688 = vmatpush1.msra.mxu0 %v665
        %689 = vmatprep.subr.mxu0 0.0
        %690 = vmatpush1.msra.mxu0 %v664
        %691 = vmatprep.subr.mxu0 0.0
        %692 = vmatpush1.msra.mxu0 %v663
        %693 = vmatprep.subr.mxu0 0.0
        %694 = vmatpush1.msra.mxu0 %v662
        %695 = vmatprep.subr.mxu0 0.0
        %696 = vmatpush1.msra.mxu0 %v661
        %697 = vmatprep.subr.mxu0 0.0
        %698 = vmatpush1.msra.mxu0 %v660
        %699 = vmatprep.subr.mxu0 0.0
        %700 = vmatpush1.msra.mxu0 %v659
        %701 = vmatprep.subr.mxu0 0.0
        %702 = vmatpush1.msra.mxu0 %v658
        %703 = vmatprep.subr.mxu0 0.0
        %704 = vmatpush1.msra.mxu0 %v657
        %705 = vmatprep.subr.mxu0 0.0
        %706 = vmatpush2.msra.mxu0 0.0
        %707 = vmatprep.subr.mxu0 0.0
        %708 = vmatpush2.msra.mxu0 0.0
        %709 = vmatprep.subr.mxu0 0.0
        %710 = vmatpush2.msra.mxu0 0.0
        %711 = vmatprep.subr.mxu0 0.0
        %712 = vmatpush2.msra.mxu0 0.0
        %713 = vmatprep.subr.mxu0 0.0
        %714 = vmatpush2.msra.mxu0 0.0
        %715 = vmatprep.subr.mxu0 0.0
        %716 = vmatpush2.msra.mxu0 0.0
        %717 = vmatprep.subr.mxu0 0.0
        %718 = vmatpush2.msra.mxu0 0.0
        %719 = vmatprep.subr.mxu0 0.0
        %720 = vmatpush2.msra.mxu0 0.0
        %721 = vmatprep.subr.mxu0 0.0
        %722 = vmatpush2.msra.mxu0 0.0
        %723 = vmatprep.subr.mxu0 0.0
        %724 = vmatpush2.msra.mxu0 0.0
        %725 = vmatprep.subr.mxu0 0.0
        %726 = vmatpush2.msra.mxu0 0.0
        %727 = vmatprep.subr.mxu0 0.0
        %728 = vmatpush2.msra.mxu0 0.0
        %729 = vmatprep.subr.mxu0 0.0
        %730 = vmatpush2.msra.mxu0 0.0
        %731 = vmatprep.subr.mxu0 0.0
        %732 = vmatpush2.msra.mxu0 0.0
        %733 = vmatprep.subr.mxu0 0.0
        %734 = vmatpush2.msra.mxu0 0.0
        %735 = vmatprep.subr.mxu0 0.0
        %736 = vmatpush2.msra.mxu0 0.0
        %737 = vmatprep.mubr.f32.mxu0 0.0
        %738 = vmatmul.mubr.f32.gmra.mxu0 %v461
        %v739 = vpop.f32.mrf.mxu0
        %v740 = vadd.f32 0.0, %v739
        %v741 = vpop.f32.mrf.mxu0
        %742 = vdwg.mxu0
        %743 = vmatprep.subr.mxu0 0.0
        %744 = vmatpush1.msra.mxu0 %v656
        %745 = vmatprep.subr.mxu0 0.0
        %746 = vmatpush1.msra.mxu0 %v655
        %747 = vmatprep.subr.mxu0 0.0
        %748 = vmatpush1.msra.mxu0 %v654
        %749 = vmatprep.subr.mxu0 0.0
        %750 = vmatpush1.msra.mxu0 %v653
        %751 = vmatprep.subr.mxu0 0.0
        %752 = vmatpush1.msra.mxu0 %v652
        %753 = vmatprep.subr.mxu0 0.0
        %754 = vmatpush1.msra.mxu0 %v651
        %755 = vmatprep.subr.mxu0 0.0
        %756 = vmatpush1.msra.mxu0 %v650
        %757 = vmatprep.subr.mxu0 0.0
        %758 = vmatpush1.msra.mxu0 %v649
        %759 = vmatprep.subr.mxu0 0.0
        %760 = vmatpush1.msra.mxu0 %v648
        %761 = vmatprep.subr.mxu0 0.0
        %762 = vmatpush1.msra.mxu0 %v647
        %763 = vmatprep.subr.mxu0 0.0
        %764 = vmatpush1.msra.mxu0 %v646
        %765 = vmatprep.subr.mxu0 0.0
        %766 = vmatpush1.msra.mxu0 %v645
        %767 = vmatprep.subr.mxu0 0.0
        %768 = vmatpush1.msra.mxu0 %v644
        %769 = vmatprep.subr.mxu0 0.0
        %770 = vmatpush1.msra.mxu0 %v643
        %771 = vmatprep.subr.mxu0 0.0
        %772 = vmatpush1.msra.mxu0 %v642
        %773 = vmatprep.subr.mxu0 0.0
        %774 = vmatpush1.msra.mxu0 %v641
        %775 = vmatprep.subr.mxu0 0.0
        %776 = vmatpush2.msra.mxu0 0.0
        %777 = vmatprep.subr.mxu0 0.0
        %778 = vmatpush2.msra.mxu0 0.0
        %779 = vmatprep.subr.mxu0 0.0
        %780 = vmatpush2.msra.mxu0 0.0
        %781 = vmatprep.subr.mxu0 0.0
        %782 = vmatpush2.msra.mxu0 0.0
        %783 = vmatprep.subr.mxu0 0.0
        %784 = vmatpush2.msra.mxu0 0.0
        %785 = vmatprep.subr.mxu0 0.0
        %786 = vmatpush2.msra.mxu0 0.0
        %787 = vmatprep.subr.mxu0 0.0
        %788 = vmatpush2.msra.mxu0 0.0
        %789 = vmatprep.subr.mxu0 0.0
        %790 = vmatpush2.msra.mxu0 0.0
        %791 = vmatprep.subr.mxu0 0.0
        %792 = vmatpush2.msra.mxu0 0.0
        %793 = vmatprep.subr.mxu0 0.0
        %794 = vmatpush2.msra.mxu0 0.0
        %795 = vmatprep.subr.mxu0 0.0
        %796 = vmatpush2.msra.mxu0 0.0
        %797 = vmatprep.subr.mxu0 0.0
        %798 = vmatpush2.msra.mxu0 0.0
        %799 = vmatprep.subr.mxu0 0.0
        %800 = vmatpush2.msra.mxu0 0.0
        %801 = vmatprep.subr.mxu0 0.0
        %802 = vmatpush2.msra.mxu0 0.0
        %803 = vmatprep.subr.mxu0 0.0
        %804 = vmatpush2.msra.mxu0 0.0
        %805 = vmatprep.subr.mxu0 0.0
        %806 = vmatpush2.msra.mxu0 0.0
        %807 = vmatprep.mubr.f32.mxu0 0.0
        %808 = vmatmul.mubr.f32.gmra.mxu0 %v638
        %v809 = vpop.f32.mrf.mxu0
        %v810 = vadd.f32 %v740, %v809
        %v811 = vpop.f32.mrf.mxu0
        %812 = vdwg.mxu0
        %v813 = vtanh.pop %v810
        %814 = vst [vmem:[%s353] sm:$0xff] %v813
        %815 = vst [vmem:[%s360] sm:$0xff] %v570
        %s816 = sand.u32 %s154, 1
        %s817 = scalar_lea.sflag [#allocation4], %s816
        %s818 = sand.u32 %s154, 1
        %s819 = smul.addr %s818, 8
        %s820 = scalar_lea.vmem [#allocation11], %s819
        %s821 = sand.u32 %s180, 1
        %s822 = scalar_lea.sflag [#allocation13], %s821
        %s823 = sand.u32 %s180, 1
        %s824 = smul.addr %s823, 8
        %s825 = scalar_lea.vmem [#allocation12], %s824
        // Predicated region
        $region68: #{tpu_custom_call.1} parent=39 // pred_check
          %p826 = pneg %p164
        $region69: #{tpu_custom_call.1} parent=39 // pred_check_branch
          %828 = sbr.rel (%p826) target = $region71
        $region70: #{tpu_custom_call.1} parent=39 // pred_region
          %s830 = ssub.s32 128, 128
          %831 = vsyncadd %s817, %s830
          %s832 = smul.addr %s31, 128
          %s833 = scalar_lea.hbm %s5, %s832
          %s835 = sshll.u32 %s820, 4
          %s836 = int_to_ptr.vmem [resolvable:$true] %s835
          %838 = dma.vmem_to_hbm [thread:$0]  %s836, 128, %s833, %s817
        $region71: #{tpu_custom_call.1} parent=39 // pred_fallthru
          _
        // Predicated region
        $region72: #{tpu_custom_call.1} parent=39 // pred_check
          %p839 = pneg %p190
        $region73: #{tpu_custom_call.1} parent=39 // pred_check_branch
          %841 = sbr.rel (%p839) target = $region75
        $region74: #{tpu_custom_call.1} parent=39 // pred_region
          %s843 = ssub.s32 128, 128
          %844 = vsyncadd %s822, %s843
          %s845 = smul.addr %s31, 128
          %s846 = scalar_lea.hbm %s6, %s845
          %s848 = sshll.u32 %s825, 4
          %s849 = int_to_ptr.vmem [resolvable:$true] %s848
          %851 = dma.vmem_to_hbm [thread:$0]  %s849, 128, %s846, %s822
        $region75: #{tpu_custom_call.1} parent=39 // pred_fallthru
          _
      $region40: #{tpu_custom_call.1} parent=5 // pred_fallthru
        _
      %p852 = scmp.le.s32.totalorder 2, %s26
      // Predicated region
      $region76: #{tpu_custom_call.1} parent=5 // pred_check
        %p853 = pneg %p852
      $region77: #{tpu_custom_call.1} parent=5 // pred_check_branch
        %855 = sbr.rel (%p853) target = $region79
      $region78: #{tpu_custom_call.1} parent=5 // pred_region
        %s856 = ssub.s32 %s26, 2
        // Predicated region
        $region80: #{tpu_custom_call.1} parent=78 // pred_check
          %p857 = pneg %p170
        $region81: #{tpu_custom_call.1} parent=78 // pred_check_branch
          %859 = sbr.rel (%p857) target = $region83
        $region82: #{tpu_custom_call.1} parent=78 // pred_region
          %s860 = sand.u32 %s155, 1
          %s861 = scalar_lea.sflag [#allocation4], %s860
          %s862 = sand.u32 %s155, 1
          %s863 = smul.addr %s862, 8
          %s864 = scalar_lea.vmem [#allocation11], %s863
          %865 = dma.done %s861, 128
        $region83: #{tpu_custom_call.1} parent=78 // pred_fallthru
          _
        // Predicated region
        $region84: #{tpu_custom_call.1} parent=78 // pred_check
          %p866 = pneg %p196
        $region85: #{tpu_custom_call.1} parent=78 // pred_check_branch
          %868 = sbr.rel (%p866) target = $region87
        $region86: #{tpu_custom_call.1} parent=78 // pred_region
          %s869 = sand.u32 %s181, 1
          %s870 = scalar_lea.sflag [#allocation13], %s869
          %s871 = sand.u32 %s181, 1
          %s872 = smul.addr %s871, 8
          %s873 = scalar_lea.vmem [#allocation12], %s872
          %874 = dma.done %s870, 128
        $region87: #{tpu_custom_call.1} parent=78 // pred_fallthru
          _
      $region79: #{tpu_custom_call.1} parent=5 // pred_fallthru
        _
    $region6: #{tpu_custom_call.1} parent=1 // loop_footer
      %s30 = sadd.s32 1, %s26
    $region7: #{tpu_custom_call.1} parent=1 // loop_footer_branch
      %25 = sbr.rel target = $region3
    $region8: #{tpu_custom_call.1} parent=1 // loop_exit
      _
    %875 = vsyncpa [#allocation3], 1
    %s876 = scalar_lea.sflag [#allocation3], 1
    %877 = vsyncpa %s876, 1
    %878 = vsyncpa [#allocation6], 1
    %s879 = scalar_lea.sflag [#allocation6], 1
    %880 = vsyncpa %s879, 1
    %881 = vsyncpa [#allocation9], 1
    %882 = vsyncpa [#allocation4], 1
    %s883 = scalar_lea.sflag [#allocation4], 1
    %884 = vsyncpa %s883, 1
    %885 = vsyncpa [#allocation13], 1
    %s886 = scalar_lea.sflag [#allocation13], 1
    %887 = vsyncpa %s886, 1

</llo_original>
